<compile_context>
chip_gen: v7x
topology: tpu7x:2x2x1
jax: 0.10.0
libtpu: 0.0.40
codegen_flags: <defaults>
</compile_context>

<pallas_src>
import jax
import jax.numpy as jnp
from jax import lax
from jax.experimental import pallas as pl
from jax.experimental.pallas import tpu as pltpu

LANES = 128  # padded hidden width (lane dim of every hidden activation)


def _round_up(n, m):
    return ((n + m - 1) // m) * m


def _default_compute_dtype():
    """bf16 MXU path on v6e/v7x; f32 on v5e and older (no bf16 VPU/EUP)."""
    try:
        kind = jax.devices()[0].device_kind.lower()
    except Exception:
        return jnp.float32
    for old in ("v2", "v3", "v4", "v5"):
        if old in kind:
            return jnp.float32
    return jnp.bfloat16


def _gbo_kernel(x_ref, w1_ref, w2_ref, w3_ref, b12_ref, bf3_ref, o_ref):
    """One batch tile of: factors * sigmoid(relu(relu(x@w1+b1)@w2+b2)@w3+b3).

    Layouts:
      x_ref   : (tile_b, in_dim)   input at natural width (cast in-kernel)
      w1_ref  : (in_dim, 128)      layer-1 weights, out-dim zero padded
      w2_ref  : (128, 128)         layer-2 weights, zero padded
      w3_ref  : (out_pad, 128)     layer-3 weights TRANSPOSED (rows = outputs)
      b12_ref : (8, 128) f32       row0 = b1, row1 = b2 (zero padded)
      bf3_ref : (out_pad, 128) f32 col0 = b3, col1 = factors
      o_ref   : (out_dim, tile_b)  batch on lanes -> lane-dense scalar output
    """
    cd = w1_ref.dtype
    out_dim = o_ref.shape[0]

    x = x_ref[...].astype(cd)

    # Layer 1: Linear + ReLU (MXU matmul, f32 accumulate). K = in_dim (32).
    h = jnp.dot(x, w1_ref[...], preferred_element_type=jnp.float32)
    h = jnp.maximum(h + b12_ref[0:1, :], 0.0)

    # Layer 2: Linear + ReLU.
    h = jnp.dot(h.astype(cd), w2_ref[...], preferred_element_type=jnp.float32)
    h = jnp.maximum(h + b12_ref[1:2, :], 0.0)

    # Output layer with the batch dim on lanes:
    #   (out_pad, H) contracted with (tile_b, H) on H  ->  (out_pad, tile_b)
    y = lax.dot_general(
        w3_ref[...], h.astype(cd),
        dimension_numbers=(((1,), (1,)), ((), ())),
        preferred_element_type=jnp.float32,
    )
    # Only the first `out_dim` rows are live: bias/sigmoid(EUP)/scale run on
    # 1/128th of the lanes-per-row the padded formulation needed.
    y = y[0:out_dim, :] + bf3_ref[0:out_dim, 0:1]
    y = bf3_ref[0:out_dim, 1:2] * jax.nn.sigmoid(y)
    o_ref[...] = y.astype(o_ref.dtype)


def pack_params(params, compute_dtype=jnp.float32):
    """Zero-pad the tiny weight matrices and pack biases/factors into slabs."""
    w1, b1, w2, b2, w3, b3, factors = params
    in_dim = w1.shape[0]
    out_dim = w3.shape[1]
    out_pad = max(8, _round_up(out_dim, 8))

    def pad2(w, shape):
        out = jnp.zeros(shape, dtype=compute_dtype)
        return out.at[: w.shape[0], : w.shape[1]].set(w.astype(compute_dtype))

    w1_p = pad2(w1, (in_dim, LANES))       # (in_dim, 128)
    w2_p = pad2(w2, (LANES, LANES))        # (128, 128)
    w3_p = pad2(w3.T, (out_pad, LANES))    # (out_pad, 128), rows = output units

    def pad_row(v):
        v = v.reshape(-1).astype(jnp.float32)
        out = jnp.zeros((LANES,), jnp.float32)
        return out.at[: v.shape[0]].set(v)

    b12 = jnp.zeros((8, LANES), jnp.float32)
    b12 = b12.at[0].set(pad_row(b1)).at[1].set(pad_row(b2))

    bf3 = jnp.zeros((out_pad, LANES), jnp.float32)
    bf3 = bf3.at[:out_dim, 0].set(b3.reshape(-1).astype(jnp.float32))
    bf3 = bf3.at[:out_dim, 1].set(factors.reshape(-1).astype(jnp.float32))
    return w1_p, w2_p, w3_p, b12, bf3


def gbo_forward(x, params, *, compute_dtype=None, tile_b=2048):
    """Forward pass matching GBOModel: factors * sigmoid(MLP(x))."""
    batch, in_dim = x.shape
    out_dim = params[6].shape[-1]
    if compute_dtype is None:
        compute_dtype = _default_compute_dtype()

    w1_p, w2_p, w3_p, b12, bf3 = pack_params(params, compute_dtype)
    out_pad = w3_p.shape[0]

    # Batch tile selection:
    #  * small batch  -> one exact-size tile (block == full array dims is legal)
    #  * larger batch -> tiles that are multiples of 128 (output lane dim),
    #    capped so there are >=2 grid steps (keeps both v7x TCs busy on the
    #    "parallel" batch axis), ragged last tile handled by Pallas masking.
    if batch <= 256:
        tile_b = batch
    else:
        tile_b = min(tile_b, _round_up(pl.cdiv(batch, 2), 128))
        tile_b = max(tile_b, 128)
    n_tiles = pl.cdiv(batch, tile_b)
    # VMEM note: at tile_b=2048 the double-buffered x tile is ~0.5 MiB and the
    # resident weight slabs ~0.2 MiB -- far under every generation's scoped
    # limit (incl. v7x's 64 MiB physical), so no vmem_limit_bytes override.

    w_itemsize = jnp.dtype(compute_dtype).itemsize
    flops = 2 * batch * (in_dim * LANES + LANES * LANES + LANES * out_pad)
    bytes_accessed = (
        batch * in_dim * x.dtype.itemsize                      # x (natural width)
        + (w1_p.size + w2_p.size + w3_p.size) * w_itemsize     # resident weights
        + (b12.size + bf3.size) * 4                            # biases + factors
        + out_dim * batch * 4                                  # lane-dense output
    )

    out = pl.pallas_call(
        _gbo_kernel,
        out_shape=jax.ShapeDtypeStruct((out_dim, batch), jnp.float32),
        grid=(n_tiles,),
        in_specs=[
            pl.BlockSpec((tile_b, in_dim), lambda i: (i, 0)),   # x: tiled over batch
            pl.BlockSpec((in_dim, LANES), lambda i: (0, 0)),    # weights: VMEM-resident
            pl.BlockSpec((LANES, LANES), lambda i: (0, 0)),
            pl.BlockSpec((out_pad, LANES), lambda i: (0, 0)),
            pl.BlockSpec((8, LANES), lambda i: (0, 0)),         # b1/b2
            pl.BlockSpec((out_pad, LANES), lambda i: (0, 0)),   # b3/factors
        ],
        out_specs=pl.BlockSpec((out_dim, tile_b), lambda i: (0, i)),
        compiler_params=pltpu.CompilerParams(
            dimension_semantics=("parallel",),                  # shard batch across TCs
        ),
        cost_estimate=pl.CostEstimate(
            flops=flops,
            transcendentals=batch * out_dim,                    # sigmoid on live rows only
            bytes_accessed=bytes_accessed,
        ),
    )(x, w1_p, w2_p, w3_p, b12, bf3)

    return out.T  # (batch, out_dim)


def init_params(key, input_dim, hidden_dims, output_dim):
    """Deterministic synthetic init mirroring nn.Linear shapes
    (stored transposed: (in_features, out_features))."""
    dims = [input_dim] + list(hidden_dims) + [output_dim]
    params = []
    keys = jax.random.split(key, 2 * (len(dims) - 1))
    for i in range(len(dims) - 1):
        fan_in = dims[i]
        bound = 1.0 / jnp.sqrt(fan_in)
        w = jax.random.uniform(keys[2 * i], (dims[i], dims[i + 1]),
                               minval=-bound, maxval=bound, dtype=jnp.float32)
        b = jax.random.uniform(keys[2 * i + 1], (1, dims[i + 1]),
                               minval=-bound, maxval=bound, dtype=jnp.float32)
        params.extend([w, b])
    factors = jnp.full((1, output_dim), 5.0, dtype=jnp.float32)  # registered buffer
    params.append(factors)
    return tuple(params)


def reference_forward(x, params):
    (w1, b1, w2, b2, w3, b3, factors) = params
    h = jnp.maximum(x @ w1 + b1, 0.0)
    h = jnp.maximum(h @ w2 + b2, 0.0)
    y = jax.nn.sigmoid(h @ w3 + b3)
    return factors * y


if __name__ == "__main__":
    input_dim = 32
    hidden_dims = [64, 32]
    output_dim = 1
    batch = 8

    key = jax.random.PRNGKey(0)
    kx, kp = jax.random.split(key)
    x = jax.random.normal(kx, (batch, input_dim), dtype=jnp.float32)
    params = init_params(kp, input_dim, hidden_dims, output_dim)

    ref = reference_forward(x, params)

    # Exact-precision path (f32 matmuls) -- tight tolerance vs reference.
    out_f32 = jax.block_until_ready(gbo_forward(x, params, compute_dtype=jnp.float32))
    assert out_f32.shape == (batch, output_dim)
    assert jnp.allclose(out_f32, ref, atol=1e-5, rtol=1e-5), "f32 mismatch vs reference"

    # Default path (bf16 MXU on v6e/v7x, f32 on v5e) -- looser tolerance for bf16.
    out_auto = jax.block_until_ready(gbo_forward(x, params))
    assert jnp.allclose(out_auto, ref, atol=1e-1, rtol=5e-2), "default-dtype mismatch"

    # Multi-tile, ragged batch: exercises partial last blocks on both the
    # x sublane dim and the lane-dense output dim.
    xb = jax.random.normal(kx, (1100, input_dim), dtype=jnp.float32)
    out_big = jax.block_until_ready(gbo_forward(xb, params, compute_dtype=jnp.float32))
    ref_big = reference_forward(xb, params)
    assert out_big.shape == (1100, output_dim)
    assert jnp.allclose(out_big, ref_big, atol=1e-5, rtol=1e-5), "tiled mismatch"

    print("KERNEL_OK")
</pallas_src>

<mosaic_0001>
module attributes {stable_mosaic.version = 11 : i64} {
  func.func @_gbo_kernel(%arg0: i32, %arg1: memref<8x32xf32, #tpu.memory_space<vmem>>, %arg2: memref<32x128xf32, #tpu.memory_space<vmem>>, %arg3: memref<128x128xf32, #tpu.memory_space<vmem>>, %arg4: memref<8x128xf32, #tpu.memory_space<vmem>>, %arg5: memref<8x128xf32, #tpu.memory_space<vmem>>, %arg6: memref<8x128xf32, #tpu.memory_space<vmem>>, %arg7: memref<1x8xf32, #tpu.memory_space<vmem>>) attributes {dimension_semantics = [#tpu.dimension_semantics<parallel>], iteration_bounds = array<i64: 1>, scalar_prefetch = 0 : i64, scratch_operands = 0 : i64, tpu.core_type = #tpu.core_type<tc>, window_params = [{transform_indices = @transform_0, window_bounds = array<i64: 8, 32>}, {pipeline_mode = #tpu.pipeline_mode<synchronous>, transform_indices = @transform_1, window_bounds = array<i64: 32, 128>}, {pipeline_mode = #tpu.pipeline_mode<synchronous>, transform_indices = @transform_2, window_bounds = array<i64: 128, 128>}, {pipeline_mode = #tpu.pipeline_mode<synchronous>, transform_indices = @transform_3, window_bounds = array<i64: 8, 128>}, {pipeline_mode = #tpu.pipeline_mode<synchronous>, transform_indices = @transform_4, window_bounds = array<i64: 8, 128>}, {pipeline_mode = #tpu.pipeline_mode<synchronous>, transform_indices = @transform_5, window_bounds = array<i64: 8, 128>}, {transform_indices = @transform_6, window_bounds = array<i64: 1, 8>}]} {
    %c0 = arith.constant 0 : index
    %c0_0 = arith.constant 0 : index
    %0 = vector.load %arg1[%c0, %c0_0] : memref<8x32xf32, #tpu.memory_space<vmem>>, vector<8x32xf32>
    %c0_1 = arith.constant 0 : index
    %c0_2 = arith.constant 0 : index
    %1 = vector.load %arg2[%c0_1, %c0_2] : memref<32x128xf32, #tpu.memory_space<vmem>>, vector<32x128xf32>
    %cst = arith.constant dense<0.000000e+00> : vector<8x128xf32>
    %2 = tpu.matmul %0, %1, %cst {dimension_numbers = #tpu.dot_dimension_numbers<[1], [0], [0], [1], [0, 0, 1, 1], [], []>} : vector<8x32xf32>, vector<32x128xf32>, vector<8x128xf32> -> vector<8x128xf32>
    %c0_3 = arith.constant 0 : index
    %c0_4 = arith.constant 0 : index
    %3 = vector.load %arg5[%c0_3, %c0_4] : memref<8x128xf32, #tpu.memory_space<vmem>>, vector<1x128xf32>
    %4 = vector.broadcast %3 : vector<1x128xf32> to vector<8x128xf32>
    %5 = arith.addf %2, %4 : vector<8x128xf32>
    %cst_5 = arith.constant 0.000000e+00 : f32
    %6 = vector.broadcast %cst_5 : f32 to vector<8x128xf32>
    %7 = arith.maximumf %5, %6 : vector<8x128xf32>
    %c0_6 = arith.constant 0 : index
    %c0_7 = arith.constant 0 : index
    %8 = vector.load %arg3[%c0_6, %c0_7] : memref<128x128xf32, #tpu.memory_space<vmem>>, vector<128x128xf32>
    %cst_8 = arith.constant dense<0.000000e+00> : vector<8x128xf32>
    %9 = tpu.matmul %7, %8, %cst_8 {dimension_numbers = #tpu.dot_dimension_numbers<[1], [0], [0], [1], [0, 0, 1, 1], [], []>} : vector<8x128xf32>, vector<128x128xf32>, vector<8x128xf32> -> vector<8x128xf32>
    %c1 = arith.constant 1 : index
    %c0_9 = arith.constant 0 : index
    %10 = vector.load %arg5[%c1, %c0_9] : memref<8x128xf32, #tpu.memory_space<vmem>>, vector<1x128xf32>
    %11 = vector.broadcast %10 : vector<1x128xf32> to vector<8x128xf32>
    %12 = arith.addf %9, %11 : vector<8x128xf32>
    %cst_10 = arith.constant 0.000000e+00 : f32
    %13 = vector.broadcast %cst_10 : f32 to vector<8x128xf32>
    %14 = arith.maximumf %12, %13 : vector<8x128xf32>
    %c0_11 = arith.constant 0 : index
    %c0_12 = arith.constant 0 : index
    %15 = vector.load %arg4[%c0_11, %c0_12] : memref<8x128xf32, #tpu.memory_space<vmem>>, vector<8x128xf32>
    %cst_13 = arith.constant dense<0.000000e+00> : vector<8x8xf32>
    %16 = tpu.matmul %15, %14, %cst_13 {dimension_numbers = #tpu.dot_dimension_numbers<[1], [1], [0], [0], [0, 0, 1, 0], [], []>} : vector<8x128xf32>, vector<8x128xf32>, vector<8x8xf32> -> vector<8x8xf32>
    %17 = vector.extract_strided_slice %16 {offsets = [0, 0], sizes = [1, 8], strides = [1, 1]} : vector<8x8xf32> to vector<1x8xf32>
    %c0_14 = arith.constant 0 : index
    %c0_15 = arith.constant 0 : index
    %18 = vector.load %arg6[%c0_14, %c0_15] : memref<8x128xf32, #tpu.memory_space<vmem>>, vector<1x1xf32>
    %19 = vector.broadcast %18 : vector<1x1xf32> to vector<1x8xf32>
    %20 = arith.addf %17, %19 : vector<1x8xf32>
    %c0_16 = arith.constant 0 : index
    %c1_17 = arith.constant 1 : index
    %21 = vector.load %arg6[%c0_16, %c1_17] : memref<8x128xf32, #tpu.memory_space<vmem>>, vector<1x1xf32>
    %22 = arith.negf %20 : vector<1x8xf32>
    %23 = math.exp %22 : vector<1x8xf32>
    %cst_18 = arith.constant 1.000000e+00 : f32
    %24 = vector.broadcast %cst_18 : f32 to vector<1x8xf32>
    %25 = arith.addf %24, %23 : vector<1x8xf32>
    %26 = arith.divf %24, %25 : vector<1x8xf32>
    %27 = vector.broadcast %21 : vector<1x1xf32> to vector<1x8xf32>
    %28 = arith.mulf %27, %26 : vector<1x8xf32>
    %c0_19 = arith.constant 0 : index
    %c0_20 = arith.constant 0 : index
    %29 = vector.load %arg7[%c0_19, %c0_20] : memref<1x8xf32, #tpu.memory_space<vmem>>, vector<1x8xf32>
    tpu.vector_store %arg7[%c0_19, %c0_20], %28 {strides = array<i32>} : memref<1x8xf32, #tpu.memory_space<vmem>>, vector<1x8xf32>,
    return
  }
  func.func @transform_0(%arg0: i32) -> (i32, i32) {
    %c0_i32 = arith.constant 0 : i32
    %c0_i32_0 = arith.constant 0 : i32
    return %arg0, %c0_i32 : i32, i32
  }
  func.func @transform_1(%arg0: i32) -> (i32, i32) {
    %c0_i32 = arith.constant 0 : i32
    %c0_i32_0 = arith.constant 0 : i32
    %c0_i32_1 = arith.constant 0 : i32
    return %c0_i32, %c0_i32_0 : i32, i32
  }
  func.func @transform_2(%arg0: i32) -> (i32, i32) {
    %c0_i32 = arith.constant 0 : i32
    %c0_i32_0 = arith.constant 0 : i32
    %c0_i32_1 = arith.constant 0 : i32
    return %c0_i32, %c0_i32_0 : i32, i32
  }
  func.func @transform_3(%arg0: i32) -> (i32, i32) {
    %c0_i32 = arith.constant 0 : i32
    %c0_i32_0 = arith.constant 0 : i32
    %c0_i32_1 = arith.constant 0 : i32
    return %c0_i32, %c0_i32_0 : i32, i32
  }
  func.func @transform_4(%arg0: i32) -> (i32, i32) {
    %c0_i32 = arith.constant 0 : i32
    %c0_i32_0 = arith.constant 0 : i32
    %c0_i32_1 = arith.constant 0 : i32
    return %c0_i32, %c0_i32_0 : i32, i32
  }
  func.func @transform_5(%arg0: i32) -> (i32, i32) {
    %c0_i32 = arith.constant 0 : i32
    %c0_i32_0 = arith.constant 0 : i32
    %c0_i32_1 = arith.constant 0 : i32
    return %c0_i32, %c0_i32_0 : i32, i32
  }
  func.func @transform_6(%arg0: i32) -> (i32, i32) {
    %c0_i32 = arith.constant 0 : i32
    %c0_i32_0 = arith.constant 0 : i32
    return %c0_i32, %arg0 : i32, i32
  }
}

</mosaic_0001>

<llo_original>
// kernel: tpu_custom_call.1
$region0: #{tpu_custom_call.1}
  #allocation0 [shape = 'u32[]', space=smem, size = 0x4, offset = 0x4, fixed_abs, tag = 'smem constant byte address 0x4 - core index']
  #allocation1 [shape = 'u32[144,128]{1,0:T(1,128)}', space=vmem, size = 0x12000, scoped, tag = 'internal scratch']
  %s0 = inlined_call_operand.hbm [shape: f32[8,32], index: 0, kind: input, shape index: {}]
  %s1 = inlined_call_operand.hbm [shape: f32[32,128], index: 1, kind: input, shape index: {}]
  %s2 = inlined_call_operand.hbm [shape: f32[128,128], index: 2, kind: input, shape index: {}]
  %s3 = inlined_call_operand.vmem [shape: f32[8,128], index: 3, kind: input, shape index: {}]
  %s4 = inlined_call_operand.hbm [shape: f32[8,128], index: 4, kind: input, shape index: {}]
  %s5 = inlined_call_operand.vmem [shape: f32[8,128], index: 5, kind: input, shape index: {}]
  %s6 = inlined_call_operand.hbm [shape: f32[1,8], index: 6, kind: output, shape index: {}]
  %s7 = sld [smem:[#allocation0]]
  $region50: #{tpu_custom_call.1} parent=0
    _
  %s9 = ssub.s32 1, %s7
  %s10 = scalar_select 0, %s9, %s7
  $region1: #{tpu_custom_call.1} parent=0
    #allocation2 [shape = 'u8[4096]{0}', space=vmem, size = 0x1000, scoped, tag = 'input window, operand 0, single buffered']
    #allocation3 [shape = 's32[1]{0}', space=sflag, size = 0x4, scoped, tag = 'scoped memory for tpu_custom_call.1']
    #allocation4 [shape = 's32[1]{0}', space=sflag, size = 0x4, scoped, tag = 'scoped memory for tpu_custom_call.1']
    #allocation5 [shape = 'u8[16384]{0}', space=vmem, size = 0x4000, scoped, tag = 'input window, operand 1, single buffered']
    #allocation6 [shape = 's32[1]{0}', space=sflag, size = 0x4, scoped, tag = 'scoped memory for tpu_custom_call.1']
    #allocation7 [shape = 'u8[65536]{0}', space=vmem, size = 0x10000, scoped, tag = 'input window, operand 2, single buffered']
    #allocation8 [shape = 'u8[4096]{0}', space=vmem, size = 0x1000, scoped, tag = 'input window, operand 4, single buffered']
    #allocation9 [shape = 's32[1]{0}', space=sflag, size = 0x4, scoped, tag = 'scoped memory for tpu_custom_call.1']
    #allocation10 [shape = 'u8[512]{0}', space=vmem, size = 0x400, scoped, tag = 'output window, operand 0, single buffered']
    %11 = vsyncpa [#allocation3], 0
    %12 = vsyncpa [#allocation6], 0
    %13 = vsyncpa [#allocation9], 0
    %14 = vsyncpa [#allocation4], 0
    // Predicated region
    $region2: #{tpu_custom_call.1} parent=1 // pred_check
      _
    $region3: #{tpu_custom_call.1} parent=1 // pred_check_branch
      %16 = sbr.rel (0) target = $region5
    $region4: #{tpu_custom_call.1} parent=1 // pred_region
      %s18 = ssub.s32 128, 128
      %19 = vsyncadd [#allocation3], %s18
      %s21 = sshll.u32 [#allocation2], 4
      %s22 = int_to_ptr.vmem [resolvable:$true] %s21
      %24 = dma.hbm_to_vmem [thread:$0]  %s0, 128, %s22, [#allocation3]
    $region5: #{tpu_custom_call.1} parent=1 // pred_fallthru
      _
    // Predicated region
    $region6: #{tpu_custom_call.1} parent=1 // pred_check
      _
    $region7: #{tpu_custom_call.1} parent=1 // pred_check_branch
      %26 = sbr.rel (0) target = $region9
    $region8: #{tpu_custom_call.1} parent=1 // pred_region
      %s28 = ssub.s32 512, 512
      %29 = vsyncadd [#allocation6], %s28
      %s30 = sshll.u32 [#allocation5], 4
      %s31 = int_to_ptr.vmem [resolvable:$true] %s30
      %36 = dma.hbm_to_vmem [thread:$0]  %s1, 512, %s31, [#allocation6], 128, 128, 8
    $region9: #{tpu_custom_call.1} parent=1 // pred_fallthru
      _
    // Predicated region
    $region10: #{tpu_custom_call.1} parent=1 // pred_check
      _
    $region11: #{tpu_custom_call.1} parent=1 // pred_check_branch
      %38 = sbr.rel (0) target = $region13
    $region12: #{tpu_custom_call.1} parent=1 // pred_region
      %s40 = ssub.s32 2048, 2048
      %41 = vsyncadd [#allocation6], %s40
      %s42 = sshll.u32 [#allocation7], 4
      %s43 = int_to_ptr.vmem [resolvable:$true] %s42
      %48 = dma.hbm_to_vmem [thread:$0]  %s2, 2048, %s43, [#allocation6], 128, 128, 8
    $region13: #{tpu_custom_call.1} parent=1 // pred_fallthru
      _
    // Predicated region
    $region14: #{tpu_custom_call.1} parent=1 // pred_check
      _
    $region15: #{tpu_custom_call.1} parent=1 // pred_check_branch
      %50 = sbr.rel (0) target = $region17
    $region16: #{tpu_custom_call.1} parent=1 // pred_region
      _
    $region17: #{tpu_custom_call.1} parent=1 // pred_fallthru
      _
    // Predicated region
    $region18: #{tpu_custom_call.1} parent=1 // pred_check
      _
    $region19: #{tpu_custom_call.1} parent=1 // pred_check_branch
      %52 = sbr.rel (0) target = $region21
    $region20: #{tpu_custom_call.1} parent=1 // pred_region
      %s54 = ssub.s32 128, 128
      %55 = vsyncadd [#allocation9], %s54
      %s57 = sshll.u32 [#allocation8], 4
      %s58 = int_to_ptr.vmem [resolvable:$true] %s57
      %60 = dma.hbm_to_vmem [thread:$0]  %s4, 128, %s58, [#allocation9]
    $region21: #{tpu_custom_call.1} parent=1 // pred_fallthru
      _
    // Predicated region
    $region22: #{tpu_custom_call.1} parent=1 // pred_check
      _
    $region23: #{tpu_custom_call.1} parent=1 // pred_check_branch
      %62 = sbr.rel (0) target = $region25
    $region24: #{tpu_custom_call.1} parent=1 // pred_region
      _
    $region25: #{tpu_custom_call.1} parent=1 // pred_fallthru
      _
    // Predicated region
    $region26: #{tpu_custom_call.1} parent=1 // pred_check
      _
    $region27: #{tpu_custom_call.1} parent=1 // pred_check_branch
      %64 = sbr.rel (0) target = $region29
    $region28: #{tpu_custom_call.1} parent=1 // pred_region
      %65 = dma.done [#allocation3], 128
    $region29: #{tpu_custom_call.1} parent=1 // pred_fallthru
      _
    // Predicated region
    $region30: #{tpu_custom_call.1} parent=1 // pred_check
      _
    $region31: #{tpu_custom_call.1} parent=1 // pred_check_branch
      %67 = sbr.rel (0) target = $region33
    $region32: #{tpu_custom_call.1} parent=1 // pred_region
      %68 = dma.done [#allocation6], 512
    $region33: #{tpu_custom_call.1} parent=1 // pred_fallthru
      _
    // Predicated region
    $region34: #{tpu_custom_call.1} parent=1 // pred_check
      _
    $region35: #{tpu_custom_call.1} parent=1 // pred_check_branch
      %70 = sbr.rel (0) target = $region37
    $region36: #{tpu_custom_call.1} parent=1 // pred_region
      %71 = dma.done [#allocation6], 2048
    $region37: #{tpu_custom_call.1} parent=1 // pred_fallthru
      _
    // Predicated region
    $region38: #{tpu_custom_call.1} parent=1 // pred_check
      _
    $region39: #{tpu_custom_call.1} parent=1 // pred_check_branch
      %73 = sbr.rel (0) target = $region41
    $region40: #{tpu_custom_call.1} parent=1 // pred_region
      %74 = dma.done [#allocation9], 128
    $region41: #{tpu_custom_call.1} parent=1 // pred_fallthru
      _
    %v75 = vld [vmem:[#allocation2] sm:$0xff]
    %v76 = vld [vmem:[#allocation5] sm:$0xff]
    %v77 = vld [vmem:[#allocation5 + $0x8] sm:$0xff]
    %v78 = vld [vmem:[#allocation5 + $0x10] sm:$0xff]
    %v79 = vld [vmem:[#allocation5 + $0x18] sm:$0xff]
    %v80 = vld [vmem:[#allocation8] sm:$0x1]
    %v81 = vlaneseq
    %v82 = vshrl.u32 %v81, 7
    %v83 = vsub.s32 0, %v82
    %v84 = vrot.slane %v80, %v83
    %vm85 = vcmask 261120
    %v87 = vsel %vm85, %v75, 0
    %89 = vmatprep.subr.mxu0 0.0
    %90 = vmatpush1.msra.mxu0 %v76
    %91 = vmatprep.subr.mxu0 0.0
    %92 = vmatpush1.msra.mxu0 %v77
    %93 = vmatprep.subr.mxu0 0.0
    %94 = vmatpush1.msra.mxu0 %v78
    %95 = vmatprep.subr.mxu0 0.0
    %96 = vmatpush1.msra.mxu0 %v79
    %97 = vmatprep.subr.mxu0 0.0
    %98 = vmatpush1.msra.mxu0 0.0
    %99 = vmatprep.subr.mxu0 0.0
    %100 = vmatpush1.msra.mxu0 0.0
    %101 = vmatprep.subr.mxu0 0.0
    %102 = vmatpush1.msra.mxu0 0.0
    %103 = vmatprep.subr.mxu0 0.0
    %104 = vmatpush1.msra.mxu0 0.0
    %105 = vmatprep.subr.mxu0 0.0
    %106 = vmatpush1.msra.mxu0 0.0
    %107 = vmatprep.subr.mxu0 0.0
    %108 = vmatpush1.msra.mxu0 0.0
    %109 = vmatprep.subr.mxu0 0.0
    %110 = vmatpush1.msra.mxu0 0.0
    %111 = vmatprep.subr.mxu0 0.0
    %112 = vmatpush1.msra.mxu0 0.0
    %113 = vmatprep.subr.mxu0 0.0
    %114 = vmatpush1.msra.mxu0 0.0
    %115 = vmatprep.subr.mxu0 0.0
    %116 = vmatpush1.msra.mxu0 0.0
    %117 = vmatprep.subr.mxu0 0.0
    %118 = vmatpush1.msra.mxu0 0.0
    %119 = vmatprep.subr.mxu0 0.0
    %120 = vmatpush1.msra.mxu0 0.0
    %121 = vmatprep.subr.mxu0 0.0
    %122 = vmatpush1.msra.mxu0 0.0
    %123 = vmatprep.subr.mxu0 0.0
    %124 = vmatpush1.msra.mxu0 0.0
    %125 = vmatprep.subr.mxu0 0.0
    %126 = vmatpush1.msra.mxu0 0.0
    %127 = vmatprep.subr.mxu0 0.0
    %128 = vmatpush1.msra.mxu0 0.0
    %129 = vmatprep.subr.mxu0 0.0
    %130 = vmatpush1.msra.mxu0 0.0
    %131 = vmatprep.subr.mxu0 0.0
    %132 = vmatpush1.msra.mxu0 0.0
    %133 = vmatprep.subr.mxu0 0.0
    %134 = vmatpush1.msra.mxu0 0.0
    %135 = vmatprep.subr.mxu0 0.0
    %136 = vmatpush1.msra.mxu0 0.0
    %137 = vmatprep.subr.mxu0 0.0
    %138 = vmatpush1.msra.mxu0 0.0
    %139 = vmatprep.subr.mxu0 0.0
    %140 = vmatpush1.msra.mxu0 0.0
    %141 = vmatprep.subr.mxu0 0.0
    %142 = vmatpush1.msra.mxu0 0.0
    %143 = vmatprep.subr.mxu0 0.0
    %144 = vmatpush1.msra.mxu0 0.0
    %145 = vmatprep.subr.mxu0 0.0
    %146 = vmatpush1.msra.mxu0 0.0
    %147 = vmatprep.subr.mxu0 0.0
    %148 = vmatpush1.msra.mxu0 0.0
    %149 = vmatprep.subr.mxu0 0.0
    %150 = vmatpush1.msra.mxu0 0.0
    %151 = vmatprep.subr.mxu0 0.0
    %152 = vmatpush1.msra.mxu0 0.0
    %153 = vmatprep.mubr.f32.mxu0 0.0
    %154 = vmatmul.mubr.f32.gmra.mrb[0].mxu0 %v87
    %v155 = vpop.f32.mrb[0].mxu0
    %v156 = vadd.f32 %v84, %v155
    %v157 = vpop.f32.mrb[0].mxu0
    %158 = vdwg.mxu0
    %v159 = vmax.f32 %v156, 0.0
    %v160 = vld [vmem:[#allocation7] sm:$0xff]
    %v161 = vld [vmem:[#allocation7 + $0x8] sm:$0xff]
    %v162 = vld [vmem:[#allocation7 + $0x10] sm:$0xff]
    %v163 = vld [vmem:[#allocation7 + $0x18] sm:$0xff]
    %v164 = vld [vmem:[#allocation7 + $0x20] sm:$0xff]
    %v165 = vld [vmem:[#allocation7 + $0x28] sm:$0xff]
    %v166 = vld [vmem:[#allocation7 + $0x30] sm:$0xff]
    %v167 = vld [vmem:[#allocation7 + $0x38] sm:$0xff]
    %v168 = vld [vmem:[#allocation7 + $0x40] sm:$0xff]
    %v169 = vld [vmem:[#allocation7 + $0x48] sm:$0xff]
    %v170 = vld [vmem:[#allocation7 + $0x50] sm:$0xff]
    %v171 = vld [vmem:[#allocation7 + $0x58] sm:$0xff]
    %v172 = vld [vmem:[#allocation7 + $0x60] sm:$0xff]
    %v173 = vld [vmem:[#allocation7 + $0x68] sm:$0xff]
    %v174 = vld [vmem:[#allocation7 + $0x70] sm:$0xff]
    %v175 = vld [vmem:[#allocation7 + $0x78] sm:$0xff]
    %v176 = vld [vmem:[#allocation8 + $0x1] sm:$0x1]
    %v177 = vlaneseq
    %v178 = vshrl.u32 %v177, 7
    %v179 = vsub.s32 0, %v178
    %v180 = vrot.slane %v176, %v179
    %181 = vmatprep.subr.mxu0 0.0
    %182 = vmatpush1.msra.mxu0 %v160
    %183 = vmatprep.subr.mxu0 0.0
    %184 = vmatpush1.msra.mxu0 %v161
    %185 = vmatprep.subr.mxu0 0.0
    %186 = vmatpush1.msra.mxu0 %v162
    %187 = vmatprep.subr.mxu0 0.0
    %188 = vmatpush1.msra.mxu0 %v163
    %189 = vmatprep.subr.mxu0 0.0
    %190 = vmatpush1.msra.mxu0 %v164
    %191 = vmatprep.subr.mxu0 0.0
    %192 = vmatpush1.msra.mxu0 %v165
    %193 = vmatprep.subr.mxu0 0.0
    %194 = vmatpush1.msra.mxu0 %v166
    %195 = vmatprep.subr.mxu0 0.0
    %196 = vmatpush1.msra.mxu0 %v167
    %197 = vmatprep.subr.mxu0 0.0
    %198 = vmatpush1.msra.mxu0 %v168
    %199 = vmatprep.subr.mxu0 0.0
    %200 = vmatpush1.msra.mxu0 %v169
    %201 = vmatprep.subr.mxu0 0.0
    %202 = vmatpush1.msra.mxu0 %v170
    %203 = vmatprep.subr.mxu0 0.0
    %204 = vmatpush1.msra.mxu0 %v171
    %205 = vmatprep.subr.mxu0 0.0
    %206 = vmatpush1.msra.mxu0 %v172
    %207 = vmatprep.subr.mxu0 0.0
    %208 = vmatpush1.msra.mxu0 %v173
    %209 = vmatprep.subr.mxu0 0.0
    %210 = vmatpush1.msra.mxu0 %v174
    %211 = vmatprep.subr.mxu0 0.0
    %212 = vmatpush1.msra.mxu0 %v175
    %213 = vmatprep.subr.mxu0 0.0
    %214 = vmatpush1.msra.mxu0 0.0
    %215 = vmatprep.subr.mxu0 0.0
    %216 = vmatpush1.msra.mxu0 0.0
    %217 = vmatprep.subr.mxu0 0.0
    %218 = vmatpush1.msra.mxu0 0.0
    %219 = vmatprep.subr.mxu0 0.0
    %220 = vmatpush1.msra.mxu0 0.0
    %221 = vmatprep.subr.mxu0 0.0
    %222 = vmatpush1.msra.mxu0 0.0
    %223 = vmatprep.subr.mxu0 0.0
    %224 = vmatpush1.msra.mxu0 0.0
    %225 = vmatprep.subr.mxu0 0.0
    %226 = vmatpush1.msra.mxu0 0.0
    %227 = vmatprep.subr.mxu0 0.0
    %228 = vmatpush1.msra.mxu0 0.0
    %229 = vmatprep.subr.mxu0 0.0
    %230 = vmatpush1.msra.mxu0 0.0
    %231 = vmatprep.subr.mxu0 0.0
    %232 = vmatpush1.msra.mxu0 0.0
    %233 = vmatprep.subr.mxu0 0.0
    %234 = vmatpush1.msra.mxu0 0.0
    %235 = vmatprep.subr.mxu0 0.0
    %236 = vmatpush1.msra.mxu0 0.0
    %237 = vmatprep.subr.mxu0 0.0
    %238 = vmatpush1.msra.mxu0 0.0
    %239 = vmatprep.subr.mxu0 0.0
    %240 = vmatpush1.msra.mxu0 0.0
    %241 = vmatprep.subr.mxu0 0.0
    %242 = vmatpush1.msra.mxu0 0.0
    %243 = vmatprep.subr.mxu0 0.0
    %244 = vmatpush1.msra.mxu0 0.0
    %245 = vmatprep.mubr.f32.mxu0 0.0
    %246 = vmatmul.mubr.f32.gmra.mrb[0].mxu0 %v159
    %v247 = vpop.f32.mrb[0].mxu0
    %v248 = vadd.f32 %v180, %v247
    %v249 = vpop.f32.mrb[0].mxu0
    %250 = vdwg.mxu0
    %v251 = vmax.f32 %v248, 0.0
    %v252 = vld [vmem:[%s3] sm:$0xff]
    %253 = vmatprep.subr.mxu0 0.0
    %254 = vmatpush1.xpose.msra.mxu0 %v251
    %255 = vmatprep.subr.mxu0 0.0
    %256 = vmatpush1.xpose.msra.mxu0 0.0
    %257 = vmatprep.subr.mxu0 0.0
    %258 = vmatpush1.xpose.msra.mxu0 0.0
    %259 = vmatprep.subr.mxu0 0.0
    %260 = vmatpush1.xpose.msra.mxu0 0.0
    %261 = vmatprep.subr.mxu0 0.0
    %262 = vmatpush1.xpose.msra.mxu0 0.0
    %263 = vmatprep.subr.mxu0 0.0
    %264 = vmatpush1.xpose.msra.mxu0 0.0
    %265 = vmatprep.subr.mxu0 0.0
    %266 = vmatpush1.xpose.msra.mxu0 0.0
    %267 = vmatprep.subr.mxu0 0.0
    %268 = vmatpush1.xpose.msra.mxu0 0.0
    %269 = vmatprep.subr.mxu0 0.0
    %270 = vmatpush1.xpose.msra.mxu0 0.0
    %271 = vmatprep.subr.mxu0 0.0
    %272 = vmatpush1.xpose.msra.mxu0 0.0
    %273 = vmatprep.subr.mxu0 0.0
    %274 = vmatpush1.xpose.msra.mxu0 0.0
    %275 = vmatprep.subr.mxu0 0.0
    %276 = vmatpush1.xpose.msra.mxu0 0.0
    %277 = vmatprep.subr.mxu0 0.0
    %278 = vmatpush1.xpose.msra.mxu0 0.0
    %279 = vmatprep.subr.mxu0 0.0
    %280 = vmatpush1.xpose.msra.mxu0 0.0
    %281 = vmatprep.subr.mxu0 0.0
    %282 = vmatpush1.xpose.msra.mxu0 0.0
    %283 = vmatprep.subr.mxu0 0.0
    %284 = vmatpush1.xpose.msra.mxu0 0.0
    %285 = vmatprep.subr.mxu0 0.0
    %286 = vmatpush1.xpose.msra.mxu0 0.0
    %287 = vmatprep.subr.mxu0 0.0
    %288 = vmatpush1.xpose.msra.mxu0 0.0
    %289 = vmatprep.subr.mxu0 0.0
    %290 = vmatpush1.xpose.msra.mxu0 0.0
    %291 = vmatprep.subr.mxu0 0.0
    %292 = vmatpush1.xpose.msra.mxu0 0.0
    %293 = vmatprep.subr.mxu0 0.0
    %294 = vmatpush1.xpose.msra.mxu0 0.0
    %295 = vmatprep.subr.mxu0 0.0
    %296 = vmatpush1.xpose.msra.mxu0 0.0
    %297 = vmatprep.subr.mxu0 0.0
    %298 = vmatpush1.xpose.msra.mxu0 0.0
    %299 = vmatprep.subr.mxu0 0.0
    %300 = vmatpush1.xpose.msra.mxu0 0.0
    %301 = vmatprep.subr.mxu0 0.0
    %302 = vmatpush1.xpose.msra.mxu0 0.0
    %303 = vmatprep.subr.mxu0 0.0
    %304 = vmatpush1.xpose.msra.mxu0 0.0
    %305 = vmatprep.subr.mxu0 0.0
    %306 = vmatpush1.xpose.msra.mxu0 0.0
    %307 = vmatprep.subr.mxu0 0.0
    %308 = vmatpush1.xpose.msra.mxu0 0.0
    %309 = vmatprep.subr.mxu0 0.0
    %310 = vmatpush1.xpose.msra.mxu0 0.0
    %311 = vmatprep.subr.mxu0 0.0
    %312 = vmatpush1.xpose.msra.mxu0 0.0
    %313 = vmatprep.subr.mxu0 0.0
    %314 = vmatpush1.xpose.msra.mxu0 0.0
    %315 = vmatprep.subr.mxu0 0.0
    %316 = vmatpush1.xpose.msra.mxu0 0.0
    %317 = vmatprep.mubr.f32.mxu0 0.0
    %318 = vmatmul.mubr.f32.gmra.mrb[0].mxu0 %v252
    %v319 = vpop.f32.mrb[0].mxu0
    %v320 = vadd.f32 0.0, %v319
    %v321 = vpop.f32.mrb[0].mxu0
    %322 = vdwg.mxu0
    %v323 = vld [vmem:[%s5] sm:$0x1]
    %325 = vset.pattern.permute.xlu0 0
    %326 = vperm.xlu0 %325, %v323
    %v327 = vpop.permute.xlu0 %326
    %v329 = vadd.f32 %v320, %v327
    %v330 = vxor.u32 %v329, 2147483648
    %v331 = vmul.f32 %v330, 1.442695
    %v332 = vpow.pop %v331
    %v333 = vadd.f32 %v332, 1.0
    %v334 = vrcp.pop %v333
    %v335 = vmul.f32 1.0, %v334
    %336 = vset.pattern.permute.xlu0 1
    %337 = vperm.xlu0 %336, %v323
    %v338 = vpop.permute.xlu0 %337
    %v340 = vmul.f32 %v338, %v335
    %vm341 = vcmask 57344
    %342 = vst.msk [vmem:[#allocation10] sm:$0x1] %vm341, %v340
    // Predicated region
    $region42: #{tpu_custom_call.1} parent=1 // pred_check
      _
    $region43: #{tpu_custom_call.1} parent=1 // pred_check_branch
      %344 = sbr.rel (0) target = $region45
    $region44: #{tpu_custom_call.1} parent=1 // pred_region
      %s346 = ssub.s32 16, 16
      %347 = vsyncadd [#allocation4], %s346
      %s349 = sshll.u32 [#allocation10], 4
      %s350 = int_to_ptr.vmem [resolvable:$true] %s349
      %352 = dma.vmem_to_hbm [thread:$0]  %s350, 16, %s6, [#allocation4]
    $region45: #{tpu_custom_call.1} parent=1 // pred_fallthru
      _
    // Predicated region
    $region46: #{tpu_custom_call.1} parent=1 // pred_check
      _
    $region47: #{tpu_custom_call.1} parent=1 // pred_check_branch
      %354 = sbr.rel (0) target = $region49
    $region48: #{tpu_custom_call.1} parent=1 // pred_region
      %355 = dma.done [#allocation4], 16
    $region49: #{tpu_custom_call.1} parent=1 // pred_fallthru
      _
    %356 = vsyncpa [#allocation3], 1
    %357 = vsyncpa [#allocation6], 1
    %358 = vsyncpa [#allocation9], 1
    %359 = vsyncpa [#allocation4], 1

</llo_original>
